<compile_context>
chip_gen: v5e
topology: v5e:2x2
jax: 0.10.0
libtpu: 0.0.40
codegen_flags: <defaults>
</compile_context>

<pallas_src>
import functools

import jax
import jax.numpy as jnp
from jax.experimental import pallas as pl
from jax.experimental.pallas import tpu as pltpu


def _round_up(a: int, b: int) -> int:
    return (a + b - 1) // b * b


def _patch_embed_kernel(p_ref, w_ref, b_ref, o_ref):
    # p_ref: (TM, K) patch-row tile; w_ref: (K, N) resident weights;
    # b_ref: (1, N) bias; o_ref: (TM, N) lane-dense output tile.
    acc = jnp.dot(p_ref[...], w_ref[...], preferred_element_type=jnp.float32)
    o_ref[...] = (acc + b_ref[...].astype(jnp.float32)).astype(o_ref.dtype)


@functools.partial(
    jax.jit, static_argnames=("kernel_size", "stride", "tile_m", "compute_dtype")
)
def patch_embed(x, weight, bias, *, kernel_size=(8, 8), stride=(8, 8),
                tile_m=512, compute_dtype=None):
    """
    x:      [B, C, H, W]            (NCHW, matching the PyTorch module input)
    weight: [embed_dim, C, kh, kw]  (PyTorch Conv2d weight layout)
    bias:   [embed_dim]
    returns [B, H//kh, W//kw, embed_dim]  (== conv output permuted (0,2,3,1))
    """
    assert kernel_size == stride, "PatchEmbed uses kernel_size == stride"
    B, C, H, W = x.shape
    kh, kw = kernel_size
    E = weight.shape[0]
    assert weight.shape == (E, C, kh, kw)
    Hp, Wp = H // kh, W // kw

    M = B * Hp * Wp
    K = C * kh * kw
    N = _round_up(E, 128)                      # lane-dense output width

    # --- glue: extract non-overlapping patches, flatten in (C, kh, kw) order ---
    # (B, C, Hp, kh, Wp, kw) -> (B, Hp, Wp, C, kh, kw) -> (B*Hp*Wp, C*kh*kw)
    patches = x.reshape(B, C, Hp, kh, Wp, kw)
    patches = patches.transpose(0, 2, 4, 1, 3, 5)
    patches = patches.reshape(M, K)

    # Conv2d weight flattened the same way: (E, C*kh*kw) -> (K, E); pad to N lanes.
    w_mat = weight.reshape(E, K).T
    b_vec = bias
    if N != E:
        w_mat = jnp.pad(w_mat, ((0, 0), (0, N - E)))
        b_vec = jnp.pad(b_vec, (0, N - E))
    b_mat = b_vec.reshape(1, N)

    if compute_dtype is not None:
        patches = patches.astype(compute_dtype)
        w_mat = w_mat.astype(compute_dtype)

    # Row-tile size: multiple of 8 sublanes, 512 (multiple of 256 for the MXU)
    # at realistic sizes; exact fit for tiny problems.
    TM = min(tile_m, _round_up(M, 8))
    M_pad = _round_up(M, TM)
    if M_pad != M:
        patches = jnp.pad(patches, ((0, M_pad - M), (0, 0)))

    out = pl.pallas_call(
        _patch_embed_kernel,
        out_shape=jax.ShapeDtypeStruct((M_pad, N), x.dtype),
        grid_spec=pltpu.PrefetchScalarGridSpec(
            num_scalar_prefetch=0,
            grid=(M_pad // TM,),
            in_specs=[
                pl.BlockSpec((TM, K), lambda i: (i, 0)),   # patch-row tile
                pl.BlockSpec((K, N), lambda i: (0, 0)),    # weights (resident)
                pl.BlockSpec((1, N), lambda i: (0, 0)),    # bias (resident)
            ],
            out_specs=pl.BlockSpec((TM, N), lambda i: (i, 0)),
        ),
        compiler_params=pltpu.CompilerParams(
            dimension_semantics=("parallel",),             # 2 TCs on v7x
        ),
    )(patches, w_mat, b_mat)

    # --- glue: drop row/lane padding, reshape to NHWC ---
    return out[:M, :E].reshape(B, Hp, Wp, E)


if __name__ == "__main__":
    # Small shapes consistent with the module: in_chans=4, embed_dim=32,
    # kernel_size=stride=(8, 8), image 16x16, batch 2.
    key = jax.random.PRNGKey(0)
    k_x, k_w, k_b = jax.random.split(key, 3)

    B, C, H, W = 2, 4, 16, 16
    kh, kw = 8, 8
    E = 32

    x = jax.random.normal(k_x, (B, C, H, W), dtype=jnp.float32)
    weight = jax.random.normal(k_w, (E, C, kh, kw), dtype=jnp.float32) * 0.02
    bias = jax.random.normal(k_b, (E,), dtype=jnp.float32) * 0.02

    out = patch_embed(x, weight, bias, kernel_size=(kh, kw), stride=(kh, kw))
    out = jax.block_until_ready(out)

    # Cross-check against XLA's conv (NCHW conv, then permute to NHWC).
    ref = jax.lax.conv_general_dilated(
        x, weight, window_strides=(kh, kw), padding="VALID",
        dimension_numbers=("NCHW", "OIHW", "NCHW"),
    ) + bias.reshape(1, E, 1, 1)
    ref = jnp.transpose(ref, (0, 2, 3, 1))
    assert out.shape == (B, H // kh, W // kw, E)
    assert jnp.allclose(out, ref, atol=1e-4, rtol=1e-4)

    print("KERNEL_OK")
</pallas_src>

<mosaic_0001>
module attributes {stable_mosaic.version = 11 : i64} {
  func.func @_patch_embed_kernel(%arg0: i32, %arg1: memref<8x256xf32, #tpu.memory_space<vmem>>, %arg2: memref<256x128xf32, #tpu.memory_space<vmem>>, %arg3: memref<1x128xf32, #tpu.memory_space<vmem>>, %arg4: memref<8x128xf32, #tpu.memory_space<vmem>>) attributes {dimension_semantics = [#tpu.dimension_semantics<parallel>], iteration_bounds = array<i64: 1>, scalar_prefetch = 0 : i64, scratch_operands = 0 : i64, tpu.core_type = #tpu.core_type<tc>, window_params = [{transform_indices = @transform_0, window_bounds = array<i64: 8, 256>}, {pipeline_mode = #tpu.pipeline_mode<synchronous>, transform_indices = @transform_1, window_bounds = array<i64: 256, 128>}, {pipeline_mode = #tpu.pipeline_mode<synchronous>, transform_indices = @transform_2, window_bounds = array<i64: 1, 128>}, {transform_indices = @transform_3, window_bounds = array<i64: 8, 128>}]} {
    %c0 = arith.constant 0 : index
    %c0_0 = arith.constant 0 : index
    %0 = vector.load %arg1[%c0, %c0_0] : memref<8x256xf32, #tpu.memory_space<vmem>>, vector<8x256xf32>
    %c0_1 = arith.constant 0 : index
    %c0_2 = arith.constant 0 : index
    %1 = vector.load %arg2[%c0_1, %c0_2] : memref<256x128xf32, #tpu.memory_space<vmem>>, vector<256x128xf32>
    %cst = arith.constant dense<0.000000e+00> : vector<8x128xf32>
    %2 = tpu.matmul %0, %1, %cst {dimension_numbers = #tpu.dot_dimension_numbers<[1], [0], [0], [1], [0, 0, 1, 1], [], []>} : vector<8x256xf32>, vector<256x128xf32>, vector<8x128xf32> -> vector<8x128xf32>
    %c0_3 = arith.constant 0 : index
    %c0_4 = arith.constant 0 : index
    %3 = vector.load %arg3[%c0_3, %c0_4] : memref<1x128xf32, #tpu.memory_space<vmem>>, vector<1x128xf32>
    %4 = vector.broadcast %3 : vector<1x128xf32> to vector<8x128xf32>
    %5 = arith.addf %2, %4 : vector<8x128xf32>
    %c0_5 = arith.constant 0 : index
    %c0_6 = arith.constant 0 : index
    %6 = vector.load %arg4[%c0_5, %c0_6] : memref<8x128xf32, #tpu.memory_space<vmem>>, vector<8x128xf32>
    tpu.vector_store %arg4[%c0_5, %c0_6], %5 {strides = array<i32>} : memref<8x128xf32, #tpu.memory_space<vmem>>, vector<8x128xf32>,
    return
  }
  func.func @transform_0(%arg0: i32) -> (i32, i32) {
    %c0_i32 = arith.constant 0 : i32
    %c0_i32_0 = arith.constant 0 : i32
    return %arg0, %c0_i32 : i32, i32
  }
  func.func @transform_1(%arg0: i32) -> (i32, i32) {
    %c0_i32 = arith.constant 0 : i32
    %c0_i32_0 = arith.constant 0 : i32
    %c0_i32_1 = arith.constant 0 : i32
    return %c0_i32, %c0_i32_0 : i32, i32
  }
  func.func @transform_2(%arg0: i32) -> (i32, i32) {
    %c0_i32 = arith.constant 0 : i32
    %c0_i32_0 = arith.constant 0 : i32
    %c0_i32_1 = arith.constant 0 : i32
    return %c0_i32, %c0_i32_0 : i32, i32
  }
  func.func @transform_3(%arg0: i32) -> (i32, i32) {
    %c0_i32 = arith.constant 0 : i32
    %c0_i32_0 = arith.constant 0 : i32
    return %arg0, %c0_i32 : i32, i32
  }
}

</mosaic_0001>

<llo_original>
// kernel: patch_embed.1
$region0: #{patch_embed.1}
  #allocation0 [shape = 'u32[]', space=smem, size = 0x4, offset = 0x4, fixed_abs, tag = 'smem constant byte address 0x4 - core index']
  #allocation1 [shape = 'u32[72,128]{1,0:T(1,128)}', space=vmem, size = 0x9000, scoped, tag = 'internal scratch']
  %s0 = inlined_call_operand.vmem [shape: f32[8,256], index: 0, kind: input, shape index: {}]
  %s1 = inlined_call_operand.vmem [shape: f32[256,128], index: 1, kind: input, shape index: {}]
  %s2 = inlined_call_operand.vmem [shape: f32[1,128], index: 2, kind: input, shape index: {}]
  %s3 = inlined_call_operand.hbm [shape: f32[8,128], index: 3, kind: output, shape index: {}]
  %s4 = sld [smem:[#allocation0]]
  $region22: #{patch_embed.1} parent=0
    _
  %s6 = ssub.s32 1, %s4
  %s7 = scalar_select 0, %s6, %s4
  $region1: #{patch_embed.1} parent=0
    #allocation2 [shape = 'u8[4096]{0}', space=vmem, size = 0x1000, scoped, tag = 'output window, operand 0, single buffered']
    #allocation3 [shape = 's32[1]{0}', space=sflag, size = 0x4, scoped, tag = 'scoped memory for patch_embed.1']
    %8 = vsyncpa [#allocation3], 0
    // Predicated region
    $region2: #{patch_embed.1} parent=1 // pred_check
      _
    $region3: #{patch_embed.1} parent=1 // pred_check_branch
      %10 = sbr.rel (0) target = $region5
    $region4: #{patch_embed.1} parent=1 // pred_region
      _
    $region5: #{patch_embed.1} parent=1 // pred_fallthru
      _
    // Predicated region
    $region6: #{patch_embed.1} parent=1 // pred_check
      _
    $region7: #{patch_embed.1} parent=1 // pred_check_branch
      %12 = sbr.rel (0) target = $region9
    $region8: #{patch_embed.1} parent=1 // pred_region
      _
    $region9: #{patch_embed.1} parent=1 // pred_fallthru
      _
    // Predicated region
    $region10: #{patch_embed.1} parent=1 // pred_check
      _
    $region11: #{patch_embed.1} parent=1 // pred_check_branch
      %14 = sbr.rel (0) target = $region13
    $region12: #{patch_embed.1} parent=1 // pred_region
      _
    $region13: #{patch_embed.1} parent=1 // pred_fallthru
      _
    %v15 = vld [vmem:[%s0] sm:$0xff]
    %v16 = vld [vmem:[%s0 + $0x8] sm:$0xff]
    %v17 = vld [vmem:[%s1] sm:$0xff]
    %v18 = vld [vmem:[%s1 + $0x8] sm:$0xff]
    %v19 = vld [vmem:[%s1 + $0x10] sm:$0xff]
    %v20 = vld [vmem:[%s1 + $0x18] sm:$0xff]
    %v21 = vld [vmem:[%s1 + $0x20] sm:$0xff]
    %v22 = vld [vmem:[%s1 + $0x28] sm:$0xff]
    %v23 = vld [vmem:[%s1 + $0x30] sm:$0xff]
    %v24 = vld [vmem:[%s1 + $0x38] sm:$0xff]
    %v25 = vld [vmem:[%s1 + $0x40] sm:$0xff]
    %v26 = vld [vmem:[%s1 + $0x48] sm:$0xff]
    %v27 = vld [vmem:[%s1 + $0x50] sm:$0xff]
    %v28 = vld [vmem:[%s1 + $0x58] sm:$0xff]
    %v29 = vld [vmem:[%s1 + $0x60] sm:$0xff]
    %v30 = vld [vmem:[%s1 + $0x68] sm:$0xff]
    %v31 = vld [vmem:[%s1 + $0x70] sm:$0xff]
    %v32 = vld [vmem:[%s1 + $0x78] sm:$0xff]
    %v33 = vld [vmem:[%s1 + $0x80] sm:$0xff]
    %v34 = vld [vmem:[%s1 + $0x88] sm:$0xff]
    %v35 = vld [vmem:[%s1 + $0x90] sm:$0xff]
    %v36 = vld [vmem:[%s1 + $0x98] sm:$0xff]
    %v37 = vld [vmem:[%s1 + $0xa0] sm:$0xff]
    %v38 = vld [vmem:[%s1 + $0xa8] sm:$0xff]
    %v39 = vld [vmem:[%s1 + $0xb0] sm:$0xff]
    %v40 = vld [vmem:[%s1 + $0xb8] sm:$0xff]
    %v41 = vld [vmem:[%s1 + $0xc0] sm:$0xff]
    %v42 = vld [vmem:[%s1 + $0xc8] sm:$0xff]
    %v43 = vld [vmem:[%s1 + $0xd0] sm:$0xff]
    %v44 = vld [vmem:[%s1 + $0xd8] sm:$0xff]
    %v45 = vld [vmem:[%s1 + $0xe0] sm:$0xff]
    %v46 = vld [vmem:[%s1 + $0xe8] sm:$0xff]
    %v47 = vld [vmem:[%s1 + $0xf0] sm:$0xff]
    %v48 = vld [vmem:[%s1 + $0xf8] sm:$0xff]
    %v49 = vld [vmem:[%s2] sm:$0x1]
    %v51 = vperm.slane %v49, 0
    %53 = vmatpush.msra.mxu0 %v32
    %54 = vmatpush.msra.mxu0 %v31
    %55 = vmatpush.msra.mxu0 %v30
    %56 = vmatpush.msra.mxu0 %v29
    %57 = vmatpush.msra.mxu0 %v28
    %58 = vmatpush.msra.mxu0 %v27
    %59 = vmatpush.msra.mxu0 %v26
    %60 = vmatpush.msra.mxu0 %v25
    %61 = vmatpush.msra.mxu0 %v24
    %62 = vmatpush.msra.mxu0 %v23
    %63 = vmatpush.msra.mxu0 %v22
    %64 = vmatpush.msra.mxu0 %v21
    %65 = vmatpush.msra.mxu0 %v20
    %66 = vmatpush.msra.mxu0 %v19
    %67 = vmatpush.msra.mxu0 %v18
    %68 = vmatpush.msra.mxu0 %v17
    %69 = vmatmul.f32.gmra.mxu0 %v15
    %v70 = vpop.f32.mrf.mxu0
    %v71 = vadd.f32 %v51, %v70
    %72 = vdwg.mxu0
    %73 = vmatpush.msra.mxu0 %v48
    %74 = vmatpush.msra.mxu0 %v47
    %75 = vmatpush.msra.mxu0 %v46
    %76 = vmatpush.msra.mxu0 %v45
    %77 = vmatpush.msra.mxu0 %v44
    %78 = vmatpush.msra.mxu0 %v43
    %79 = vmatpush.msra.mxu0 %v42
    %80 = vmatpush.msra.mxu0 %v41
    %81 = vmatpush.msra.mxu0 %v40
    %82 = vmatpush.msra.mxu0 %v39
    %83 = vmatpush.msra.mxu0 %v38
    %84 = vmatpush.msra.mxu0 %v37
    %85 = vmatpush.msra.mxu0 %v36
    %86 = vmatpush.msra.mxu0 %v35
    %87 = vmatpush.msra.mxu0 %v34
    %88 = vmatpush.msra.mxu0 %v33
    %89 = vmatmul.f32.gmra.mxu0 %v16
    %v90 = vpop.f32.mrf.mxu0
    %v91 = vadd.f32 %v71, %v90
    %92 = vdwg.mxu0
    %93 = vst [vmem:[#allocation2] sm:$0xff] %v91
    // Predicated region
    $region14: #{patch_embed.1} parent=1 // pred_check
      _
    $region15: #{patch_embed.1} parent=1 // pred_check_branch
      %95 = sbr.rel (0) target = $region17
    $region16: #{patch_embed.1} parent=1 // pred_region
      %97 = vsyncadd [#allocation3], 0
      %s99 = sshll.u32 [#allocation2], 4
      %s100 = int_to_ptr.vmem [resolvable:$true] %s99
      %s101 = sshll.u32 %s3, 4
      %s102 = int_to_ptr.hbm [resolvable:$true] %s101
      %104 = dma.vmem_to_hbm [thread:$0]  %s100, 128, %s102, [#allocation3]
    $region17: #{patch_embed.1} parent=1 // pred_fallthru
      _
    // Predicated region
    $region18: #{patch_embed.1} parent=1 // pred_check
      _
    $region19: #{patch_embed.1} parent=1 // pred_check_branch
      %106 = sbr.rel (0) target = $region21
    $region20: #{patch_embed.1} parent=1 // pred_region
      %108 = dma.done [#allocation3], 128
    $region21: #{patch_embed.1} parent=1 // pred_fallthru
      _
    %109 = vsyncpa [#allocation3], 1

</llo_original>
